<compile_context>
chip_gen: v7x
topology: tpu7x:2x2x1
jax: 0.10.0
libtpu: 0.0.40
codegen_flags: <defaults>
</compile_context>

<pallas_src>
import functools

import jax
import jax.numpy as jnp
from jax.experimental import pallas as pl
from jax.experimental.pallas import tpu as pltpu

LANES = 128
SUBLANES = 8
ROW_QUANT = 32        # row quantum covering f32 (8,128), bf16 (16,128), i8/bool (32,128)
MAX_TILE_ROWS = 4096  # (4096,128) block: 2 MiB f32 + 2 MiB i32 per step, ~8 MiB double-buffered


def _focal_elementwise(x_f32, is_one, *, gamma, eps, alpha):
    """Per-element focal loss; pure jnp, shared by the kernel and the JAX tail."""
    # pt = sigmoid(x) if target==1 else 1-sigmoid(x) = sigmoid(+/-x): one tanh EUP op.
    z = jnp.where(is_one, x_f32, -x_f32)
    h = 0.5 * jnp.tanh(0.5 * z)
    pt = 0.5 + h                                   # = sigmoid(z) = gathered prob
    logpt = jnp.log(pt + eps)                      # log(prob + eps), gathered
    if alpha is not None:
        a0, a1 = alpha
        logpt = logpt * jnp.where(is_one, jnp.float32(a1), jnp.float32(a0))
    g = float(gamma)
    if g == 0.0:
        return -logpt
    one_minus_pt = 0.5 - h
    if g.is_integer():
        mod = one_minus_pt ** int(g)               # integer_pow -> repeated multiplies
    elif g > 0 and (2.0 * g).is_integer():
        k = int(g - 0.5)                           # e.g. gamma=1.5 -> x*sqrt(x)
        mod = jnp.sqrt(one_minus_pt)
        if k:
            mod = mod * one_minus_pt ** k
    else:
        mod = one_minus_pt ** g                    # general pow (exp+log) fallback
    return -(mod * logpt)


def _focal_loss_kernel(x_ref, t_ref, out_ref, *, gamma, eps, alpha,
                       chunk_rows, valid_rows_last, num_blocks):
    """One grid block: chunked elementwise focal loss + (8,128) partial sum.

    x_ref   : VMEM [tile_rows, 128]  raw logits (native dtype, cast in-kernel)
    t_ref   : VMEM [tile_rows, 128]  targets (any int/bool dtype)
    out_ref : VMEM f32[8, 128]       per-block partial sums
    """
    tile_rows, lanes = x_ref.shape

    def block_sum(masked):
        rows_here = valid_rows_last if masked else tile_rows
        n_chunks = (rows_here + chunk_rows - 1) // chunk_rows
        if masked:
            # Hoisted out of the loop (JAX does not CSE broadcast_in_dim).
            row_iota = jax.lax.broadcasted_iota(jnp.int32, (chunk_rows, lanes), 0)

        def chunk_body(c, acc):
            r0 = pl.multiple_of(c * chunk_rows, chunk_rows)
            x = x_ref[pl.ds(r0, chunk_rows), :].astype(jnp.float32)
            is_one = t_ref[pl.ds(r0, chunk_rows), :] == 1
            loss = _focal_elementwise(x, is_one, gamma=gamma, eps=eps, alpha=alpha)
            if masked:
                # Block-local row bound (no global index -> no int32 overflow).
                # Keep the true select: padded garbage rows may be NaN/Inf.
                loss = jnp.where(row_iota < (valid_rows_last - c * chunk_rows),
                                 loss, 0.0)
            # (chunk//8, 8, 128) sum over the major axis: pure vreg-wise adds.
            return acc + loss.reshape(chunk_rows // SUBLANES, SUBLANES, lanes).sum(axis=0)

        acc0 = jnp.zeros((SUBLANES, lanes), jnp.float32)
        return jax.lax.fori_loop(0, n_chunks, chunk_body, acc0)

    if valid_rows_last == tile_rows:        # every block is full -> no masking anywhere
        out_ref[...] = block_sum(False)
    elif num_blocks == 1:                   # single, partially-valid block
        out_ref[...] = block_sum(True)
    else:                                   # mask only the last block
        i = pl.program_id(0)

        @pl.when(i < num_blocks - 1)
        def _():
            out_ref[...] = block_sum(False)

        @pl.when(i == num_blocks - 1)
        def _():
            out_ref[...] = block_sum(True)


def focal_loss_pallas(outputs, targets, *, gamma=0.0, alpha=None,
                      size_average=True, eps=1e-10):
    """Matches FocalLoss.forward semantics (binary, sigmoid, 2-class gather)."""
    x = outputs.reshape(-1)                       # keep native float dtype (bf16 stays bf16)
    if not jnp.issubdtype(x.dtype, jnp.floating):
        x = x.astype(jnp.float32)
    t = targets.reshape(-1)                       # keep native int/bool dtype
    if jnp.issubdtype(t.dtype, jnp.floating):
        t = t.astype(jnp.int32)                   # mirror .long() truncation

    n = x.shape[0]
    eps = float(eps)

    if alpha is None:
        alpha_pair = None
    elif isinstance(alpha, (float, int)):
        alpha_pair = (1.0 - float(alpha), float(alpha))
    else:  # list-like [alpha_class0, alpha_class1]
        alpha_pair = (float(alpha[0]), float(alpha[1]))

    rows_main = n // LANES
    tail_len = n - rows_main * LANES

    total = jnp.float32(0.0)

    if rows_main > 0:
        n_main = rows_main * LANES
        # Zero-copy when n is lane-aligned; otherwise only the aligned prefix
        # goes through the kernel and the (<128 elem) tail is handled below.
        x_main = x if tail_len == 0 else x[:n_main]
        t_main = t if tail_len == 0 else t[:n_main]
        x2 = x_main.reshape(rows_main, LANES)
        t2 = t_main.reshape(rows_main, LANES)

        rows_q = ((rows_main + ROW_QUANT - 1) // ROW_QUANT) * ROW_QUANT
        tile_rows = min(MAX_TILE_ROWS, rows_q)
        num_blocks = (rows_main + tile_rows - 1) // tile_rows
        valid_rows_last = rows_main - (num_blocks - 1) * tile_rows
        chunk_rows = 64 if tile_rows % 64 == 0 else ROW_QUANT

        kernel = functools.partial(
            _focal_loss_kernel, gamma=gamma, eps=eps, alpha=alpha_pair,
            chunk_rows=chunk_rows, valid_rows_last=valid_rows_last,
            num_blocks=num_blocks)

        partials = pl.pallas_call(
            kernel,
            out_shape=jax.ShapeDtypeStruct((num_blocks * SUBLANES, LANES), jnp.float32),
            grid_spec=pltpu.PrefetchScalarGridSpec(
                num_scalar_prefetch=0,
                grid=(num_blocks,),
                in_specs=[
                    pl.BlockSpec((tile_rows, LANES), lambda i: (i, 0)),  # logits
                    pl.BlockSpec((tile_rows, LANES), lambda i: (i, 0)),  # targets
                ],
                out_specs=pl.BlockSpec((SUBLANES, LANES), lambda i: (i, 0)),
            ),
            # NOTE: on v7x the block axis could additionally be marked
            # pltpu.CORE_PARALLEL to split blocks across both TensorCores;
            # "parallel" is kept here for portability to single-TC v5e/v6e.
            compiler_params=pltpu.CompilerParams(
                dimension_semantics=("parallel",),
                vmem_limit_bytes=32 * 1024 * 1024,
            ),
        )(x2, t2)
        total = total + jnp.sum(partials)

    if tail_len:
        # Ragged lane tail (< 128 elements): trivial plain-JAX path, avoids any
        # full-array pad of the main data.
        x_tail = x[rows_main * LANES:].astype(jnp.float32)
        t_tail = t[rows_main * LANES:]
        total = total + jnp.sum(
            _focal_elementwise(x_tail, t_tail == 1,
                               gamma=gamma, eps=eps, alpha=alpha_pair))

    if size_average:
        return total / jnp.float32(n)
    return total


def focal_loss_ref(outputs, targets, *, gamma=0.0, alpha=None,
                   size_average=True, eps=1e-10):
    """Pure-JAX reference mirroring the PyTorch forward."""
    p = jax.nn.sigmoid(outputs.reshape(-1, 1).astype(jnp.float32))
    t = targets.reshape(-1).astype(jnp.int32)
    both = jnp.concatenate([1.0 - p, p], axis=1)          # (N, 2)
    pt = jnp.take_along_axis(both, t[:, None], axis=1)[:, 0]
    logpt = jnp.take_along_axis(jnp.log(both + eps), t[:, None], axis=1)[:, 0]
    if alpha is not None:
        if isinstance(alpha, (float, int)):
            a = jnp.array([1.0 - alpha, alpha], dtype=jnp.float32)
        else:
            a = jnp.asarray(alpha, dtype=jnp.float32)
        logpt = logpt * a[t]
    loss = -((1.0 - pt) ** gamma) * logpt
    return loss.mean() if size_average else loss.sum()


if __name__ == "__main__":
    key = jax.random.PRNGKey(0)
    k1, k2, k3, k4, k5, k6, k7, k8 = jax.random.split(key, 8)

    # 1) Canonical small NCHW case: gamma=2 (integer fast path), scalar alpha, mean.
    x1 = jax.random.normal(k1, (2, 4, 16, 16), dtype=jnp.float32)
    t1 = jax.random.bernoulli(k2, 0.3, (2, 4, 16, 16)).astype(jnp.int32)
    out1 = jax.block_until_ready(
        focal_loss_pallas(x1, t1, gamma=2.0, alpha=0.25, size_average=True))
    ref1 = focal_loss_ref(x1, t1, gamma=2.0, alpha=0.25, size_average=True)
    assert jnp.allclose(out1, ref1, rtol=1e-4, atol=1e-6), (out1, ref1)

    # 2) Ragged size (lane tail), half-integer gamma (sqrt path), list alpha, sum.
    x2 = jax.random.normal(k3, (3, 5, 17, 13), dtype=jnp.float32)
    t2 = jax.random.bernoulli(k4, 0.5, (3, 5, 17, 13)).astype(jnp.int32)
    out2 = jax.block_until_ready(
        focal_loss_pallas(x2, t2, gamma=1.5, alpha=[0.6, 0.4], size_average=False))
    ref2 = focal_loss_ref(x2, t2, gamma=1.5, alpha=[0.6, 0.4], size_average=False)
    assert jnp.allclose(out2, ref2, rtol=1e-4, atol=1e-3), (out2, ref2)

    # 3) Lane-aligned single full block, gamma=0, no alpha, mean.
    x3 = jax.random.normal(k5, (5, 8, 64, 64), dtype=jnp.float32)
    t3 = jax.random.bernoulli(k6, 0.3, (5, 8, 64, 64)).astype(jnp.int32)
    out3 = jax.block_until_ready(
        focal_loss_pallas(x3, t3, gamma=0.0, alpha=None, size_average=True))
    ref3 = focal_loss_ref(x3, t3, gamma=0.0, alpha=None, size_average=True)
    assert jnp.allclose(out3, ref3, rtol=1e-4, atol=1e-6), (out3, ref3)

    # 4) Multi-block path: grid > 1, masked partial last block, plus a lane tail.
    x4 = jax.random.normal(k7, (4100, 130), dtype=jnp.float32)
    t4 = jax.random.bernoulli(k8, 0.3, (4100, 130)).astype(jnp.int32)
    out4 = jax.block_until_ready(
        focal_loss_pallas(x4, t4, gamma=2.0, alpha=0.25, size_average=True))
    ref4 = focal_loss_ref(x4, t4, gamma=2.0, alpha=0.25, size_average=True)
    assert jnp.allclose(out4, ref4, rtol=1e-4, atol=1e-6), (out4, ref4)

    # 5) bf16 logits streamed natively (cast to f32 inside the kernel).
    x5 = jax.random.normal(k1, (2, 4, 16, 16), dtype=jnp.bfloat16)
    t5 = jax.random.bernoulli(k2, 0.3, (2, 4, 16, 16)).astype(jnp.int32)
    out5 = jax.block_until_ready(
        focal_loss_pallas(x5, t5, gamma=2.0, alpha=0.25, size_average=True))
    ref5 = focal_loss_ref(x5, t5, gamma=2.0, alpha=0.25, size_average=True)
    assert jnp.allclose(out5, ref5, rtol=1e-4, atol=1e-5), (out5, ref5)

    print("KERNEL_OK")
</pallas_src>

<mosaic_0001>
module attributes {stable_mosaic.version = 11 : i64} {
  func.func @_focal_loss_kernel(%arg0: i32, %arg1: memref<32x128xf32, #tpu.memory_space<vmem>>, %arg2: memref<32x128xi32, #tpu.memory_space<vmem>>, %arg3: memref<8x128xf32, #tpu.memory_space<vmem>>) attributes {dimension_semantics = [#tpu.dimension_semantics<parallel>], iteration_bounds = array<i64: 1>, scalar_prefetch = 0 : i64, scratch_operands = 0 : i64, tpu.core_type = #tpu.core_type<tc>, window_params = [{transform_indices = @transform_0, window_bounds = array<i64: 32, 128>}, {transform_indices = @transform_1, window_bounds = array<i64: 32, 128>}, {transform_indices = @transform_2, window_bounds = array<i64: 8, 128>}]} {
    %0 = tpu.iota {dimensions = array<i32: 0>} : vector<32x128xi32>
    %cst = arith.constant 0.000000e+00 : f32
    %1 = vector.broadcast %cst : f32 to vector<8x128xf32>
    %c0_i32 = arith.constant 0 : i32
    %c32_i32 = arith.constant 32 : i32
    %2 = arith.muli %c0_i32, %c32_i32 : i32
    %3 = tpu.assume_multiple %2, 32 : i32
    %4 = arith.index_cast %3 : i32 to index
    %c0 = arith.constant 0 : index
    %5 = vector.load %arg1[%4, %c0] : memref<32x128xf32, #tpu.memory_space<vmem>>, vector<32x128xf32>
    %6 = arith.index_cast %3 : i32 to index
    %c0_0 = arith.constant 0 : index
    %7 = vector.load %arg2[%6, %c0_0] : memref<32x128xi32, #tpu.memory_space<vmem>>, vector<32x128xi32>
    %c1_i32 = arith.constant 1 : i32
    %8 = vector.broadcast %c1_i32 : i32 to vector<32x128xi32>
    %9 = arith.cmpi eq, %7, %8 : vector<32x128xi32>
    %cst_1 = arith.constant 0.000000e+00 : f32
    %10 = vector.broadcast %cst_1 : f32 to vector<32x128xf32>
    %11 = arith.subf %10, %5 : vector<32x128xf32>
    %12 = arith.select %9, %5, %11 : vector<32x128xi1>, vector<32x128xf32>
    %cst_2 = arith.constant 5.000000e-01 : f32
    %13 = vector.broadcast %cst_2 : f32 to vector<32x128xf32>
    %14 = arith.mulf %13, %12 : vector<32x128xf32>
    %15 = math.tanh %14 : vector<32x128xf32>
    %cst_3 = arith.constant 5.000000e-01 : f32
    %16 = vector.broadcast %cst_3 : f32 to vector<32x128xf32>
    %17 = arith.mulf %16, %15 : vector<32x128xf32>
    %cst_4 = arith.constant 5.000000e-01 : f32
    %18 = vector.broadcast %cst_4 : f32 to vector<32x128xf32>
    %19 = arith.addf %18, %17 : vector<32x128xf32>
    %cst_5 = arith.constant 1.000000e-10 : f32
    %20 = vector.broadcast %cst_5 : f32 to vector<32x128xf32>
    %21 = arith.addf %19, %20 : vector<32x128xf32>
    %22 = math.log %21 : vector<32x128xf32>
    %cst_6 = arith.constant 2.500000e-01 : f32
    %cst_7 = arith.constant 7.500000e-01 : f32
    %23 = vector.broadcast %cst_6 : f32 to vector<32x128xf32>
    %24 = vector.broadcast %cst_7 : f32 to vector<32x128xf32>
    %25 = arith.select %9, %23, %24 : vector<32x128xi1>, vector<32x128xf32>
    %26 = arith.mulf %22, %25 : vector<32x128xf32>
    %cst_8 = arith.constant 5.000000e-01 : f32
    %27 = vector.broadcast %cst_8 : f32 to vector<32x128xf32>
    %28 = arith.subf %27, %17 : vector<32x128xf32>
    %29 = arith.mulf %28, %28 : vector<32x128xf32>
    %30 = arith.mulf %29, %26 : vector<32x128xf32>
    %cst_9 = arith.constant 0.000000e+00 : f32
    %31 = vector.broadcast %cst_9 : f32 to vector<32x128xf32>
    %32 = arith.subf %31, %30 : vector<32x128xf32>
    %c32_i32_10 = arith.constant 32 : i32
    %33 = arith.muli %c0_i32, %c32_i32_10 : i32
    %c16_i32 = arith.constant 16 : i32
    %34 = arith.subi %c16_i32, %33 : i32
    %35 = vector.broadcast %34 : i32 to vector<32x128xi32>
    %36 = arith.cmpi slt, %0, %35 : vector<32x128xi32>
    %cst_11 = arith.constant 0.000000e+00 : f32
    %37 = vector.broadcast %cst_11 : f32 to vector<32x128xf32>
    %38 = arith.select %36, %32, %37 : vector<32x128xi1>, vector<32x128xf32>
    %39 = vector.shape_cast %38 : vector<32x128xf32> to vector<4x8x128xf32>
    %cst_12 = arith.constant dense<0.000000e+00> : vector<8x128xf32>
    %40 = vector.multi_reduction <add>, %39, %cst_12 [0] : vector<4x8x128xf32> to vector<8x128xf32>
    %41 = arith.addf %1, %40 : vector<8x128xf32>
    %c1_i32_13 = arith.constant 1 : i32
    %c0_14 = arith.constant 0 : index
    %c0_15 = arith.constant 0 : index
    %42 = vector.load %arg3[%c0_14, %c0_15] : memref<8x128xf32, #tpu.memory_space<vmem>>, vector<8x128xf32>
    tpu.vector_store %arg3[%c0_14, %c0_15], %41 {strides = array<i32>} : memref<8x128xf32, #tpu.memory_space<vmem>>, vector<8x128xf32>,
    return
  }
  func.func @transform_0(%arg0: i32) -> (i32, i32) {
    %c0_i32 = arith.constant 0 : i32
    %c0_i32_0 = arith.constant 0 : i32
    return %arg0, %c0_i32 : i32, i32
  }
  func.func @transform_1(%arg0: i32) -> (i32, i32) {
    %c0_i32 = arith.constant 0 : i32
    %c0_i32_0 = arith.constant 0 : i32
    return %arg0, %c0_i32 : i32, i32
  }
  func.func @transform_2(%arg0: i32) -> (i32, i32) {
    %c0_i32 = arith.constant 0 : i32
    %c0_i32_0 = arith.constant 0 : i32
    return %arg0, %c0_i32 : i32, i32
  }
}

</mosaic_0001>

<llo_original>
// kernel: tpu_custom_call.1
$region0: #{tpu_custom_call.1}
  #allocation0 [shape = 'u32[]', space=smem, size = 0x4, offset = 0x4, fixed_abs, tag = 'smem constant byte address 0x4 - core index']
  #allocation1 [shape = 'u32[144,128]{1,0:T(1,128)}', space=vmem, size = 0x12000, scoped, tag = 'internal scratch']
  %s0 = inlined_call_operand.hbm [shape: f32[16,128], index: 0, kind: input, shape index: {}]
  %s1 = inlined_call_operand.hbm [shape: s32[16,128], index: 1, kind: input, shape index: {}]
  %s2 = inlined_call_operand.hbm [shape: f32[8,128], index: 2, kind: output, shape index: {}]
  %s3 = sld [smem:[#allocation0]]
  $region26: #{tpu_custom_call.1} parent=0
    _
  %s5 = ssub.s32 1, %s3
  %s6 = scalar_select 0, %s5, %s3
  $region1: #{tpu_custom_call.1} parent=0
    #allocation2 [shape = 'u8[16384]{0}', space=vmem, size = 0x4000, scoped, tag = 'input window, operand 0, single buffered']
    #allocation3 [shape = 's32[1]{0}', space=sflag, size = 0x4, scoped, tag = 'scoped memory for tpu_custom_call.1']
    #allocation4 [shape = 's32[1]{0}', space=sflag, size = 0x4, scoped, tag = 'scoped memory for tpu_custom_call.1']
    #allocation5 [shape = 'u8[16384]{0}', space=vmem, size = 0x4000, scoped, tag = 'input window, operand 1, single buffered']
    #allocation6 [shape = 's32[1]{0}', space=sflag, size = 0x4, scoped, tag = 'scoped memory for tpu_custom_call.1']
    #allocation7 [shape = 'u8[4096]{0}', space=vmem, size = 0x1000, scoped, tag = 'output window, operand 0, single buffered']
    %7 = vsyncpa [#allocation3], 0
    %8 = vsyncpa [#allocation6], 0
    %9 = vsyncpa [#allocation4], 0
    // Predicated region
    $region2: #{tpu_custom_call.1} parent=1 // pred_check
      _
    $region3: #{tpu_custom_call.1} parent=1 // pred_check_branch
      %11 = sbr.rel (0) target = $region5
    $region4: #{tpu_custom_call.1} parent=1 // pred_region
      %s13 = ssub.s32 512, 256
      %14 = vsyncadd [#allocation3], %s13
      %s15 = sshll.u32 [#allocation2], 4
      %s16 = int_to_ptr.vmem [resolvable:$true] %s15
      %21 = dma.hbm_to_vmem [thread:$0]  %s0, 256, %s16, [#allocation3], 128, 128, 8
    $region5: #{tpu_custom_call.1} parent=1 // pred_fallthru
      _
    // Predicated region
    $region6: #{tpu_custom_call.1} parent=1 // pred_check
      _
    $region7: #{tpu_custom_call.1} parent=1 // pred_check_branch
      %23 = sbr.rel (0) target = $region9
    $region8: #{tpu_custom_call.1} parent=1 // pred_region
      %s25 = ssub.s32 512, 256
      %26 = vsyncadd [#allocation6], %s25
      %s27 = sshll.u32 [#allocation5], 4
      %s28 = int_to_ptr.vmem [resolvable:$true] %s27
      %33 = dma.hbm_to_vmem [thread:$0]  %s1, 256, %s28, [#allocation6], 128, 128, 8
    $region9: #{tpu_custom_call.1} parent=1 // pred_fallthru
      _
    // Predicated region
    $region10: #{tpu_custom_call.1} parent=1 // pred_check
      _
    $region11: #{tpu_custom_call.1} parent=1 // pred_check_branch
      %35 = sbr.rel (0) target = $region13
    $region12: #{tpu_custom_call.1} parent=1 // pred_region
      %36 = dma.done [#allocation3], 512
    $region13: #{tpu_custom_call.1} parent=1 // pred_fallthru
      _
    // Predicated region
    $region14: #{tpu_custom_call.1} parent=1 // pred_check
      _
    $region15: #{tpu_custom_call.1} parent=1 // pred_check_branch
      %38 = sbr.rel (0) target = $region17
    $region16: #{tpu_custom_call.1} parent=1 // pred_region
      %39 = dma.done [#allocation6], 512
    $region17: #{tpu_custom_call.1} parent=1 // pred_fallthru
      _
    %v40 = vlaneseq
    %v41 = vshrl.u32 %v40, 7
    %v42 = vadd.s32 %v41, 8
    %v43 = vadd.s32 %v41, 16
    %v44 = vadd.s32 %v41, 24
    %v45 = vld [vmem:[#allocation2] sm:$0xff]
    %v46 = vld [vmem:[#allocation2 + $0x8] sm:$0xff]
    %v47 = vld [vmem:[#allocation2 + $0x10] sm:$0xff]
    %v48 = vld [vmem:[#allocation2 + $0x18] sm:$0xff]
    %v49 = vld [vmem:[#allocation5] sm:$0xff]
    %v50 = vld [vmem:[#allocation5 + $0x8] sm:$0xff]
    %v51 = vld [vmem:[#allocation5 + $0x10] sm:$0xff]
    %v52 = vld [vmem:[#allocation5 + $0x18] sm:$0xff]
    %vm53 = vcmp.eq.s32.totalorder %v49, 1
    %vm54 = vcmp.eq.s32.totalorder %v50, 1
    %vm55 = vcmp.eq.s32.totalorder %v51, 1
    %vm56 = vcmp.eq.s32.totalorder %v52, 1
    %v57 = vsub.f32 0.0, %v45
    %v58 = vsub.f32 0.0, %v46
    %v59 = vsub.f32 0.0, %v47
    %v60 = vsub.f32 0.0, %v48
    %v61 = vsel %vm53, %v45, %v57
    %v62 = vsel %vm54, %v46, %v58
    %v63 = vsel %vm55, %v47, %v59
    %v64 = vsel %vm56, %v48, %v60
    %v65 = vmul.f32 %v61, 0.5
    %v66 = vmul.f32 %v62, 0.5
    %v67 = vmul.f32 %v63, 0.5
    %v68 = vmul.f32 %v64, 0.5
    %v69 = vtanh.pop %v65
    %v70 = vtanh.pop %v66
    %v71 = vtanh.pop %v67
    %v72 = vtanh.pop %v68
    %v73 = vmul.f32 %v69, 0.5
    %v74 = vmul.f32 %v70, 0.5
    %v75 = vmul.f32 %v71, 0.5
    %v76 = vmul.f32 %v72, 0.5
    %v77 = vadd.f32 %v73, 0.5
    %v78 = vadd.f32 %v74, 0.5
    %v79 = vadd.f32 %v75, 0.5
    %v80 = vadd.f32 %v76, 0.5
    %v81 = vadd.f32 %v77, 1e-10
    %v82 = vadd.f32 %v78, 1e-10
    %v83 = vadd.f32 %v79, 1e-10
    %v84 = vadd.f32 %v80, 1e-10
    %v85 = vlog2.pop %v81
    %v86 = vmul.f32 %v85, 0.6931472
    %v87 = vlog2.pop %v82
    %v88 = vmul.f32 %v87, 0.6931472
    %v89 = vlog2.pop %v83
    %v90 = vmul.f32 %v89, 0.6931472
    %v91 = vlog2.pop %v84
    %v92 = vmul.f32 %v91, 0.6931472
    %v93 = vsel %vm53, 0.25, 0.75
    %v94 = vsel %vm54, 0.25, 0.75
    %v95 = vsel %vm55, 0.25, 0.75
    %v96 = vsel %vm56, 0.25, 0.75
    %v97 = vmul.f32 %v86, %v93
    %v98 = vmul.f32 %v88, %v94
    %v99 = vmul.f32 %v90, %v95
    %v100 = vmul.f32 %v92, %v96
    %v101 = vsub.f32 0.5, %v73
    %v102 = vsub.f32 0.5, %v74
    %v103 = vsub.f32 0.5, %v75
    %v104 = vsub.f32 0.5, %v76
    %v105 = vmul.f32 %v101, %v101
    %v106 = vmul.f32 %v102, %v102
    %v107 = vmul.f32 %v103, %v103
    %v108 = vmul.f32 %v104, %v104
    %v109 = vmul.f32 %v105, %v97
    %v110 = vmul.f32 %v106, %v98
    %v111 = vmul.f32 %v107, %v99
    %v112 = vmul.f32 %v108, %v100
    %v113 = vsub.f32 0.0, %v109
    %v114 = vsub.f32 0.0, %v110
    %v115 = vsub.f32 0.0, %v111
    %v116 = vsub.f32 0.0, %v112
    %vm117 = vcmp.lt.s32.totalorder %v41, 16
    %vm118 = vcmp.lt.s32.totalorder %v42, 16
    %vm119 = vcmp.lt.s32.totalorder %v43, 16
    %vm120 = vcmp.lt.s32.totalorder %v44, 16
    %v121 = vsel %vm117, %v113, 0.0
    %v122 = vsel %vm118, %v114, 0.0
    %v123 = vsel %vm119, %v115, 0.0
    %v124 = vsel %vm120, %v116, 0.0
    %v125 = vadd.f32 %v121, %v122
    %v126 = vadd.f32 %v125, %v123
    %v127 = vadd.f32 %v126, %v124
    %v128 = vadd.f32 %v127, 0.0
    %129 = vst [vmem:[#allocation7] sm:$0xff] %v128
    // Predicated region
    $region18: #{tpu_custom_call.1} parent=1 // pred_check
      _
    $region19: #{tpu_custom_call.1} parent=1 // pred_check_branch
      %131 = sbr.rel (0) target = $region21
    $region20: #{tpu_custom_call.1} parent=1 // pred_region
      %s133 = ssub.s32 128, 128
      %134 = vsyncadd [#allocation4], %s133
      %s136 = sshll.u32 [#allocation7], 4
      %s137 = int_to_ptr.vmem [resolvable:$true] %s136
      %139 = dma.vmem_to_hbm [thread:$0]  %s137, 128, %s2, [#allocation4]
    $region21: #{tpu_custom_call.1} parent=1 // pred_fallthru
      _
    // Predicated region
    $region22: #{tpu_custom_call.1} parent=1 // pred_check
      _
    $region23: #{tpu_custom_call.1} parent=1 // pred_check_branch
      %141 = sbr.rel (0) target = $region25
    $region24: #{tpu_custom_call.1} parent=1 // pred_region
      %142 = dma.done [#allocation4], 128
    $region25: #{tpu_custom_call.1} parent=1 // pred_fallthru
      _
    %143 = vsyncpa [#allocation3], 1
    %144 = vsyncpa [#allocation6], 1
    %145 = vsyncpa [#allocation4], 1

</llo_original>
